<compile_context>
chip_gen: v6e
topology: v6e:2x2x1
jax: 0.10.0
libtpu: 0.0.40
codegen_flags: <defaults>
</compile_context>

<pallas_src>
import functools
import math

import numpy as np
import jax
import jax.numpy as jnp
from jax.experimental import pallas as pl
from jax.experimental.pallas import tpu as pltpu


# ----------------------------------------------------------------------------
# Helpers
# ----------------------------------------------------------------------------
def _sublane_pack(dtype):
    # dtype-native sublane packing: 8 rows/vreg for f32, 16 for bf16, 32 int8.
    return max(8, 32 // jnp.dtype(dtype).itemsize)


@functools.lru_cache(maxsize=None)
def _probe_roll_semantics():
    """Probe pltpu.roll's rotation direction once with a tiny kernel.

    Returns "jnp"     if pltpu.roll(x, +s)[i] == x[i - s]   (jnp.roll),
            "flipped" if pltpu.roll(x, +s)[i] == x[i + s],
            None      if roll is unavailable (caller uses the fallback path).
    """
    def probe(x_ref, o_ref):
        o_ref[...] = pltpu.roll(x_ref[...], shift=1, axis=1)

    try:
        x = jnp.broadcast_to(jnp.arange(128, dtype=jnp.float32), (8, 128))
        y = pl.pallas_call(
            probe, out_shape=jax.ShapeDtypeStruct((8, 128), jnp.float32))(x)
        row = np.asarray(jax.device_get(y))[0]
    except Exception:
        return None
    if row[0] == 127.0 and row[1] == 0.0 and row[2] == 1.0:
        return "jnp"
    if row[0] == 1.0 and row[1] == 2.0 and row[126] == 127.0:
        return "flipped"
    return None


def _fused_fold(b, groups):
    """Smallest row-fold k (k | b) making lanes = groups*k a multiple of 128
    with at least 8 rows left.  Returns 0 if no such fold exists."""
    if groups % 128 == 0 and b >= 8 and groups <= 8192:
        return 1
    k0 = 128 // math.gcd(groups, 128)
    k = k0
    while k <= b and k <= 4096:
        if b % k == 0 and b // k >= 8 and groups * k <= 8192:
            return k
        k += k0
    return 0


def _selection_matrix(tg, pool, leader_offset):
    # sel[k, g] = 1 iff k == g*pool + leader_offset.  0/1 is exact in bf16.
    k = np.arange(tg * pool)
    g = np.arange(tg)
    sel = (k[:, None] == (g[None, :] * pool + leader_offset)).astype(np.float32)
    return jnp.asarray(sel, dtype=jnp.bfloat16)


# ----------------------------------------------------------------------------
# Fused (transpose-free) path: contiguous tiles + roll-tree + MXU compaction
# ----------------------------------------------------------------------------
def _make_fused_kernel(pool, lanes, tg, exact_f32):
    def kernel(x_ref, sel_ref, o_ref):
        # x_ref: (TB, TG*pool) in the original interleaved layout (lane-dense).
        z = x_ref[...].astype(jnp.float32)

        # Windowed max over each group's `pool` adjacent lanes via a
        # ceil(log2(pool))-step roll/max tree (rolls use the XLU slot, maxima
        # the VPU; both hide under the HBM DMA).  The full group max lands at
        # lane g*pool + leader_offset (offset chosen from the roll probe).
        c = 1
        while c < pool:
            s = min(c, pool - c)
            z = jnp.maximum(z, pltpu.roll(z, shift=s, axis=1))
            c += s

        # Guard a partial lane block (not hit with the current tiling, where
        # lanes % tg == 0 by construction): zero garbage columns so the
        # selection matmul below cannot pick up NaN/Inf from padding.
        if lanes % tg != 0:
            j = pl.program_id(1)
            valid = jnp.minimum(tg, lanes - j * tg) * pool
            col = jax.lax.broadcasted_iota(jnp.int32, z.shape, 1)
            z = jnp.where(col < valid, z, 0.0)

        sel = sel_ref[...]  # (TG*pool, TG) constant 0/1 selection, bf16
        if exact_f32:
            # Exact f32 transport through bf16 MXU passes (bf16x3 split):
            # z == hi + mid + lo exactly, each product is value*1.0 or x*0.
            hi = z.astype(jnp.bfloat16)
            r1 = z - hi.astype(jnp.float32)
            mid = r1.astype(jnp.bfloat16)
            lo = (r1 - mid.astype(jnp.float32)).astype(jnp.bfloat16)
            out = (jnp.dot(hi, sel, preferred_element_type=jnp.float32)
                   + jnp.dot(mid, sel, preferred_element_type=jnp.float32)
                   + jnp.dot(lo, sel, preferred_element_type=jnp.float32))
        else:
            # bf16 inputs: a single bf16 matmul is already exact.
            out = jnp.dot(z.astype(jnp.bfloat16), sel,
                          preferred_element_type=jnp.float32)
        o_ref[...] = out.astype(o_ref.dtype)

    return kernel


def _pick_fused_tiles(rows, lanes, dtype):
    pack = _sublane_pack(dtype)
    # tg = 128 keeps the output lane-dense and the 3-pass selection matmul
    # under the HBM roofline on v5e/v6e/v7x.
    tg = 128
    lane_steps = -(-lanes // tg)
    # Row tile <= 512 (review: >512 buys ~1% BW but shrinks the grid) and
    # small enough that the grid has >= ~8 steps.
    row_steps_needed = -(-8 // lane_steps)
    tb = min(512, -(-rows // row_steps_needed))
    tb = max(pack, (tb // pack) * pack)
    if rows <= tb:
        tb = rows
    return tb, tg


def _maxout_fused(x2d, pool, groups, fold, roll_sem):
    b = x2d.shape[0]
    rows = b // fold
    lanes = groups * fold                      # multiple of 128 by construction
    x_wide = x2d.reshape(rows, lanes * pool)   # free, row-major reshape

    tb, tg = _pick_fused_tiles(rows, lanes, x2d.dtype)
    leader = pool - 1 if roll_sem == "jnp" else 0
    sel = _selection_matrix(tg, pool, leader)
    exact_f32 = x2d.dtype != jnp.bfloat16
    kernel = _make_fused_kernel(pool, lanes, tg, exact_f32)

    grid = (pl.cdiv(rows, tb), pl.cdiv(lanes, tg))
    out = pl.pallas_call(
        kernel,
        out_shape=jax.ShapeDtypeStruct((rows, lanes), x2d.dtype),
        grid=grid,
        in_specs=[
            pl.BlockSpec((tb, tg * pool), lambda i, j: (i, j)),
            # Constant block: fetched once, stays resident in VMEM.
            pl.BlockSpec((tg * pool, tg), lambda i, j: (0, 0)),
        ],
        out_specs=pl.BlockSpec((tb, tg), lambda i, j: (i, j)),
        compiler_params=pltpu.CompilerParams(
            dimension_semantics=("parallel", "parallel")),
    )(x_wide, sel)
    return out.reshape(b, groups)


# ----------------------------------------------------------------------------
# Fallback path (proven): deinterleave with one wrapper transpose, VPU max
# ----------------------------------------------------------------------------
def _maxout_planes_kernel(x_ref, o_ref):
    # x_ref: (pool, TB, TG) — each pool plane is a lane-dense 2-D slab.
    acc = x_ref[0]
    for p in range(1, x_ref.shape[0]):        # pool is small; fully unrolled
        acc = jnp.maximum(acc, x_ref[p])
    o_ref[...] = acc


def _pick_planes_tiles(rows, lanes, pool, dtype):
    pack = _sublane_pack(dtype)
    itemsize = jnp.dtype(dtype).itemsize
    tg = lanes if lanes <= 512 else 512
    budget = 8 * 1024 * 1024                  # live double-buffered bytes
    per_row = (pool + 1) * tg * itemsize * 2
    tb = budget // max(per_row, 1)
    tb = max(pack, min(512, (tb // pack) * pack))
    if rows <= tb:
        tb = rows                             # full dim: exempt from (8,128)
    return tb, tg


def _maxout_planes(x2d, pool, groups):
    b = x2d.shape[0]
    # Fold whole rows into the lane axis when groups < 128 so output stores
    # stay lane-dense (masked vst is the biggest single lever for small cases).
    fold = 1
    if groups < 128 and b > 1:
        cap = max(1, 512 // groups)
        for k in range(min(b, cap), 0, -1):
            if b % k == 0:
                fold = k
                break
    rows = b // fold
    lanes = groups * fold
    x3 = x2d.reshape(rows, lanes, pool)
    # This transpose costs one extra HBM read+write pass; only tiny/odd/integer
    # shapes land here — large well-formed shapes take _maxout_fused.
    xt = jnp.transpose(x3, (2, 0, 1))         # (pool, rows, lanes)

    tb, tg = _pick_planes_tiles(rows, lanes, pool, x2d.dtype)
    grid = (pl.cdiv(rows, tb), pl.cdiv(lanes, tg))
    out = pl.pallas_call(
        _maxout_planes_kernel,
        out_shape=jax.ShapeDtypeStruct((rows, lanes), x2d.dtype),
        grid=grid,
        in_specs=[pl.BlockSpec((pool, tb, tg), lambda i, j: (0, i, j))],
        out_specs=pl.BlockSpec((tb, tg), lambda i, j: (i, j)),
        compiler_params=pltpu.CompilerParams(
            dimension_semantics=("parallel", "parallel")),
    )(xt)
    return out.reshape(b, groups)


# ----------------------------------------------------------------------------
# Public wrapper
# ----------------------------------------------------------------------------
def maxout(x, pool_size):
    """Pallas Maxout; matches torch Maxout(pool_size).forward(x)."""
    *lead, f = x.shape
    assert f % pool_size == 0, (
        f"Wrong input last dim size ({f}) for Maxout({pool_size})"
    )
    groups = f // pool_size
    if pool_size == 1:
        return x.reshape(*lead, groups)

    b = int(np.prod(lead)) if lead else 1
    x2d = x.reshape(b, f)

    use_fused = x.dtype in (jnp.float32, jnp.bfloat16, jnp.float16) and b >= 8
    fold = _fused_fold(b, groups) if use_fused else 0
    roll_sem = _probe_roll_semantics() if fold else None

    if fold and roll_sem is not None:
        out2d = _maxout_fused(x2d, pool_size, groups, fold, roll_sem)
    else:
        out2d = _maxout_planes(x2d, pool_size, groups)
    return out2d.reshape(*lead, groups)


if __name__ == "__main__":
    key = jax.random.PRNGKey(0)
    pool_size = 4
    batch, hidden = 2, 32  # hidden % pool_size == 0

    x = jax.random.normal(key, (batch, hidden), dtype=jnp.float32)
    y = jax.block_until_ready(maxout(x, pool_size))
    y_ref = x.reshape(batch, hidden // pool_size, pool_size).max(-1)
    assert y.shape == (batch, hidden // pool_size), y.shape
    assert jnp.allclose(y, y_ref), "Maxout kernel mismatch vs reference"

    # Docstring example from the torch module (3x6, pool=3).
    x2 = jnp.arange(3 * 6, dtype=jnp.float32).reshape(3, 6)
    y2 = jax.block_until_ready(maxout(x2, 3))
    expected2 = jnp.array([[2.0, 5.0], [8.0, 11.0], [14.0, 17.0]])
    assert jnp.allclose(y2, expected2), "Docstring example mismatch"

    # Larger shape exercising the transpose-free fused path (partial row block).
    x3 = jax.random.normal(jax.random.PRNGKey(1), (3000, 2048),
                           dtype=jnp.float32)
    y3 = jax.block_until_ready(maxout(x3, 4))
    y3_ref = x3.reshape(3000, 512, 4).max(-1)
    assert y3.shape == (3000, 512), y3.shape
    assert jnp.allclose(y3, y3_ref), "Large-shape mismatch"

    print("KERNEL_OK")
</pallas_src>

<mosaic_0001>
module attributes {stable_mosaic.version = 11 : i64} {
  func.func @_maxout_planes_kernel(%arg0: i32, %arg1: i32, %arg2: memref<4x1x16xf32, #tpu.memory_space<vmem>>, %arg3: memref<1x16xf32, #tpu.memory_space<vmem>>) attributes {dimension_semantics = [#tpu.dimension_semantics<parallel>, #tpu.dimension_semantics<parallel>], iteration_bounds = array<i64: 1, 1>, scalar_prefetch = 0 : i64, scratch_operands = 0 : i64, tpu.core_type = #tpu.core_type<tc>, window_params = [{transform_indices = @transform_0, window_bounds = array<i64: 4, 1, 16>}, {transform_indices = @transform_1, window_bounds = array<i64: 1, 16>}]} {
    %c0 = arith.constant 0 : index
    %c0_0 = arith.constant 0 : index
    %c0_1 = arith.constant 0 : index
    %0 = vector.load %arg2[%c0, %c0_0, %c0_1] : memref<4x1x16xf32, #tpu.memory_space<vmem>>, vector<1x1x16xf32>
    %1 = vector.shape_cast %0 : vector<1x1x16xf32> to vector<1x16xf32>
    %c1 = arith.constant 1 : index
    %c0_2 = arith.constant 0 : index
    %c0_3 = arith.constant 0 : index
    %2 = vector.load %arg2[%c1, %c0_2, %c0_3] : memref<4x1x16xf32, #tpu.memory_space<vmem>>, vector<1x1x16xf32>
    %3 = vector.shape_cast %2 : vector<1x1x16xf32> to vector<1x16xf32>
    %4 = arith.maximumf %1, %3 : vector<1x16xf32>
    %c2 = arith.constant 2 : index
    %c0_4 = arith.constant 0 : index
    %c0_5 = arith.constant 0 : index
    %5 = vector.load %arg2[%c2, %c0_4, %c0_5] : memref<4x1x16xf32, #tpu.memory_space<vmem>>, vector<1x1x16xf32>
    %6 = vector.shape_cast %5 : vector<1x1x16xf32> to vector<1x16xf32>
    %7 = arith.maximumf %4, %6 : vector<1x16xf32>
    %c3 = arith.constant 3 : index
    %c0_6 = arith.constant 0 : index
    %c0_7 = arith.constant 0 : index
    %8 = vector.load %arg2[%c3, %c0_6, %c0_7] : memref<4x1x16xf32, #tpu.memory_space<vmem>>, vector<1x1x16xf32>
    %9 = vector.shape_cast %8 : vector<1x1x16xf32> to vector<1x16xf32>
    %10 = arith.maximumf %7, %9 : vector<1x16xf32>
    %c0_8 = arith.constant 0 : index
    %c0_9 = arith.constant 0 : index
    %11 = vector.load %arg3[%c0_8, %c0_9] : memref<1x16xf32, #tpu.memory_space<vmem>>, vector<1x16xf32>
    tpu.vector_store %arg3[%c0_8, %c0_9], %10 {strides = array<i32>} : memref<1x16xf32, #tpu.memory_space<vmem>>, vector<1x16xf32>,
    return
  }
  func.func @transform_0(%arg0: i32, %arg1: i32) -> (i32, i32, i32) {
    %c0_i32 = arith.constant 0 : i32
    %c0_i32_0 = arith.constant 0 : i32
    return %c0_i32, %arg0, %arg1 : i32, i32, i32
  }
  func.func @transform_1(%arg0: i32, %arg1: i32) -> (i32, i32) {
    %c0_i32 = arith.constant 0 : i32
    return %arg0, %arg1 : i32, i32
  }
}

</mosaic_0001>

<llo_original>
// kernel: tpu_custom_call.1
$region0: #{tpu_custom_call.1}
  #allocation0 [shape = 'u32[]', space=smem, size = 0x4, offset = 0x4, fixed_abs, tag = 'smem constant byte address 0x4 - core index']
  #allocation1 [shape = 'u32[144,128]{1,0:T(1,128)}', space=vmem, size = 0x12000, scoped, tag = 'internal scratch']
  %s0 = inlined_call_operand.hbm [shape: f32[4,1,16], index: 0, kind: input, shape index: {}]
  %s1 = inlined_call_operand.hbm [shape: f32[1,16], index: 1, kind: output, shape index: {}]
  %s2 = sld [smem:[#allocation0]]
  $region18: #{tpu_custom_call.1} parent=0
    _
  %s4 = ssub.s32 1, %s2
  %s5 = scalar_select 0, %s4, %s2
  $region1: #{tpu_custom_call.1} parent=0
    #allocation2 [shape = 'u8[2048]{0}', space=vmem, size = 0x800, scoped, tag = 'input window, operand 0, single buffered']
    #allocation3 [shape = 's32[1]{0}', space=sflag, size = 0x4, scoped, tag = 'scoped memory for tpu_custom_call.1']
    #allocation4 [shape = 's32[1]{0}', space=sflag, size = 0x4, scoped, tag = 'scoped memory for tpu_custom_call.1']
    #allocation5 [shape = 'u8[512]{0}', space=vmem, size = 0x400, scoped, tag = 'output window, operand 0, single buffered']
    %6 = vsyncpa [#allocation3], 0
    %7 = vsyncpa [#allocation4], 0
    // Predicated region
    $region2: #{tpu_custom_call.1} parent=1 // pred_check
      _
    $region3: #{tpu_custom_call.1} parent=1 // pred_check_branch
      %9 = sbr.rel (0) target = $region5
    $region4: #{tpu_custom_call.1} parent=1 // pred_region
      %s11 = ssub.s32 64, 64
      %12 = vsyncadd [#allocation3], %s11
      %s13 = sshll.u32 [#allocation2], 4
      %s14 = int_to_ptr.vmem [resolvable:$true] %s13
      %19 = dma.hbm_to_vmem [thread:$0]  %s0, 64, %s14, [#allocation3], 16, 16, 1
    $region5: #{tpu_custom_call.1} parent=1 // pred_fallthru
      _
    // Predicated region
    $region6: #{tpu_custom_call.1} parent=1 // pred_check
      _
    $region7: #{tpu_custom_call.1} parent=1 // pred_check_branch
      %21 = sbr.rel (0) target = $region9
    $region8: #{tpu_custom_call.1} parent=1 // pred_region
      %22 = dma.done [#allocation3], 64
    $region9: #{tpu_custom_call.1} parent=1 // pred_fallthru
      _
    %v23 = vld [vmem:[#allocation2] sm:$0x1]
    %s24 = scalar_lea.vmem [#allocation2], 1
    %v25 = vld [vmem:[%s24] sm:$0x1]
    %v26 = vmax.f32 %v23, %v25
    %s27 = scalar_lea.vmem [#allocation2], 2
    %v28 = vld [vmem:[%s27] sm:$0x1]
    %v29 = vmax.f32 %v26, %v28
    %s30 = scalar_lea.vmem [#allocation2], 3
    %v31 = vld [vmem:[%s30] sm:$0x1]
    %v32 = vmax.f32 %v29, %v31
    %vm33 = vcmask 122880
    %34 = vst.msk [vmem:[#allocation5] sm:$0x1] %vm33, %v32
    // Predicated region
    $region10: #{tpu_custom_call.1} parent=1 // pred_check
      _
    $region11: #{tpu_custom_call.1} parent=1 // pred_check_branch
      %36 = sbr.rel (0) target = $region13
    $region12: #{tpu_custom_call.1} parent=1 // pred_region
      %s38 = ssub.s32 16, 16
      %39 = vsyncadd [#allocation4], %s38
      %s41 = sshll.u32 [#allocation5], 4
      %s42 = int_to_ptr.vmem [resolvable:$true] %s41
      %44 = dma.vmem_to_hbm [thread:$0]  %s42, 16, %s1, [#allocation4]
    $region13: #{tpu_custom_call.1} parent=1 // pred_fallthru
      _
    // Predicated region
    $region14: #{tpu_custom_call.1} parent=1 // pred_check
      _
    $region15: #{tpu_custom_call.1} parent=1 // pred_check_branch
      %46 = sbr.rel (0) target = $region17
    $region16: #{tpu_custom_call.1} parent=1 // pred_region
      %47 = dma.done [#allocation4], 16
    $region17: #{tpu_custom_call.1} parent=1 // pred_fallthru
      _
    %48 = vsyncpa [#allocation3], 1
    %49 = vsyncpa [#allocation4], 1

</llo_original>
